<compile_context>
chip_gen: v6e
topology: v6e:2x2x1
jax: 0.10.0
libtpu: 0.0.40
codegen_flags: <defaults>
</compile_context>

<pallas_src>
import functools

import jax
import jax.numpy as jnp
from jax.experimental import pallas as pl
from jax.experimental.pallas import tpu as pltpu


def _round_up(v, m):
    return -(-v // m) * m


def _cdiv(a, b):
    return -(-a // b)


# ---------------------------------------------------------------------------
# Kernels
# ---------------------------------------------------------------------------

def _resnet_block_kernel_shortcut(x_ref, w0_ref, b0_ref, w1_ref, b1_ref,
                                  ws_ref, o_ref):
    """net = fc0(relu(x)); dx = fc1(relu(net)); out = shortcut(x) + dx."""
    x = x_ref[...]                                        # native dtype (f32 / bf16)
    h = jnp.maximum(x, 0.0).astype(w0_ref.dtype)          # actvn(x) -> MXU dtype
    net = jnp.dot(h, w0_ref[...], preferred_element_type=jnp.float32)
    net = net + b0_ref[...].astype(jnp.float32)           # f32 bias add (VPU)
    net_a = jnp.maximum(net, 0.0)                         # actvn(net) in f32
    dx = jnp.dot(net_a.astype(w1_ref.dtype), w1_ref[...],
                 preferred_element_type=jnp.float32)
    dx = dx + b1_ref[...].astype(jnp.float32)
    x_s = jnp.dot(x.astype(ws_ref.dtype), ws_ref[...],
                  preferred_element_type=jnp.float32)
    o_ref[...] = (x_s + dx).astype(o_ref.dtype)


def _resnet_block_kernel_identity(x_ref, w0_ref, b0_ref, w1_ref, b1_ref,
                                  o_ref):
    """Same as above but the shortcut is the identity (size_in == size_out)."""
    x = x_ref[...]
    h = jnp.maximum(x, 0.0).astype(w0_ref.dtype)
    net = jnp.dot(h, w0_ref[...], preferred_element_type=jnp.float32)
    net = net + b0_ref[...].astype(jnp.float32)
    net_a = jnp.maximum(net, 0.0)
    dx = jnp.dot(net_a.astype(w1_ref.dtype), w1_ref[...],
                 preferred_element_type=jnp.float32)
    dx = dx + b1_ref[...].astype(jnp.float32)
    o_ref[...] = (x.astype(jnp.float32) + dx).astype(o_ref.dtype)


# ---------------------------------------------------------------------------
# Generation-aware VMEM configuration and a one-time Buffered(1) capability probe
# ---------------------------------------------------------------------------

@functools.lru_cache(maxsize=None)
def _vmem_config():
    """Returns (working-set budget, vmem_limit cap) in bytes for this TPU gen."""
    vmem_cap = None
    try:
        info = pltpu.get_tpu_info()
        vmem_cap = getattr(info, "vmem_capacity_bytes", None)
    except Exception:           # info unavailable -> conservative defaults below
        vmem_cap = None
    if vmem_cap is not None and vmem_cap >= (96 << 20):    # v5e / v6e: 128 MiB
        return 88 << 20, 100 << 20
    if vmem_cap is not None and vmem_cap >= (56 << 20):    # v7x: 64 MiB per TC
        return 36 << 20, 52 << 20
    return 32 << 20, 48 << 20                              # unknown: conservative


def _probe_kernel(x_ref, w_ref, o_ref):
    o_ref[...] = x_ref[...] + w_ref[...]


@functools.lru_cache(maxsize=None)
def _single_buffered_supported():
    """One-time, narrow capability check for pipeline_mode=pl.Buffered(1)."""
    if not hasattr(pl, "Buffered"):
        return False
    try:
        x = jnp.zeros((16, 128), jnp.float32)
        w = jnp.zeros((8, 128), jnp.float32)
        out = pl.pallas_call(
            _probe_kernel,
            out_shape=jax.ShapeDtypeStruct((16, 128), jnp.float32),
            grid=(2,),
            in_specs=[
                pl.BlockSpec((8, 128), lambda i: (i, 0)),
                pl.BlockSpec((8, 128), lambda i: (0, 0),
                             pipeline_mode=pl.Buffered(1)),
            ],
            out_specs=pl.BlockSpec((8, 128), lambda i: (i, 0)),
        )(x, w)
        jax.block_until_ready(out)
        return True
    except Exception:
        return False


# ---------------------------------------------------------------------------
# Wrapper
# ---------------------------------------------------------------------------

def resnet_block_fc(x, params, *, row_tile=None, interpret=False):
    """Apply the ResnetBlockFC forward pass via a single fused Pallas kernel.

    x: (..., size_in) array.
    params: dict with 'w0' (size_in, size_h), 'b0' (size_h,),
            'w1' (size_h, size_out), 'b1' (size_out,),
            and optionally 'ws' (size_in, size_out) for the linear shortcut.
    """
    w0, b0 = params["w0"], params["b0"]
    w1, b1 = params["w1"], params["b1"]
    ws = params.get("ws", None)
    has_ws = ws is not None

    size_in, size_h = w0.shape
    size_out = w1.shape[1]
    assert x.shape[-1] == size_in
    if not has_ws:
        assert size_in == size_out, "identity shortcut requires size_in == size_out"

    lead_shape = x.shape[:-1]
    x2d = x.reshape(-1, size_in)
    n = x2d.shape[0]

    x_itemsize = jnp.dtype(x.dtype).itemsize
    w_itemsize = jnp.dtype(w0.dtype).itemsize

    # dtype-aware sublane granularity for the row tile (8 f32 / 16 bf16 / 32 i8).
    sublane = max(8, 32 // x_itemsize)

    budget, limit_cap = _vmem_config()
    single_buf = _single_buffered_supported() and not interpret
    weight_bufs = 1 if single_buf else 2

    r128 = lambda v: _round_up(v, 128)      # VMEM lane padding (estimate only)
    weight_elems = (size_in * size_h + size_h * size_out +
                    (size_in * size_out if has_ws else 0))

    def vmem_estimate(tile_rows):
        # double-buffered activation blocks (x in, out)
        act = 2 * tile_rows * (r128(size_in) + r128(size_out)) * x_itemsize
        # grid-invariant weights/biases (single- or double-buffered)
        wgt = weight_bufs * (
            (_round_up(size_in, 8) * r128(size_h)
             + _round_up(size_h, 8) * r128(size_out)
             + (_round_up(size_in, 8) * r128(size_out) if has_ws else 0)
             + r128(size_h) + r128(size_out)) * w_itemsize)
        # one set of f32 intermediates (net, dx); rest lives in vregs
        tmp = tile_rows * (r128(size_h) + r128(size_out)) * 4
        return act + wgt + tmp

    # ---- row tile: big by default, shrunk against the per-gen VMEM budget. ----
    if row_tile is None:
        tm = 1024 if x_itemsize <= 2 else 512
    else:
        tm = max(sublane, _round_up(int(row_tile), sublane))
    tm = min(tm, _round_up(max(n, 1), sublane))

    while tm > sublane and vmem_estimate(tm) > budget:
        new_tm = max(sublane, ((tm // 2) // sublane) * sublane)
        if new_tm == tm:
            break
        tm = new_tm

    # Guarantee >= 2 grid steps (ideally >= 4) so the "parallel" row axis can
    # shard across TensorCores and the pipeline has DMA/compute to overlap.
    steps = _cdiv(n, tm)
    if steps < 2 and n > sublane:
        tm = max(sublane, _round_up(_cdiv(n, 2), sublane))
    elif steps < 4 and tm > 4 * sublane:
        tm = max(sublane, _round_up(_cdiv(n, 4), sublane))
    grid = (_cdiv(n, tm),)   # ragged last block: OOB reads harmless (rows are
                             # independent), OOB output writes are masked.

    # ---- specs (no host-side padding of any operand). ----
    def const_spec(shape):
        if single_buf:
            return pl.BlockSpec(shape, lambda i: (0, 0),
                                pipeline_mode=pl.Buffered(1))
        return pl.BlockSpec(shape, lambda i: (0, 0))

    in_specs = [
        pl.BlockSpec((tm, size_in), lambda i: (i, 0)),   # x rows
        const_spec((size_in, size_h)),                   # w0
        const_spec((1, size_h)),                         # b0
        const_spec((size_h, size_out)),                  # w1
        const_spec((1, size_out)),                       # b1
    ]
    args = [x2d, w0, b0.reshape(1, size_h), w1, b1.reshape(1, size_out)]
    if has_ws:
        in_specs.append(const_spec((size_in, size_out)))
        args.append(ws)
        kernel = _resnet_block_kernel_shortcut
    else:
        kernel = _resnet_block_kernel_identity

    out_spec = pl.BlockSpec((tm, size_out), lambda i: (i, 0))

    flops = 2 * n * weight_elems
    bytes_accessed = (n * (size_in + size_out) * x_itemsize +
                      (weight_elems + size_h + size_out) * w_itemsize)
    vmem_limit = int(min(max(vmem_estimate(tm) + (4 << 20), 32 << 20), limit_cap))

    out = pl.pallas_call(
        kernel,
        out_shape=jax.ShapeDtypeStruct((n, size_out), x.dtype),
        grid_spec=pltpu.PrefetchScalarGridSpec(
            num_scalar_prefetch=0,
            grid=grid,
            in_specs=in_specs,
            out_specs=out_spec,
        ),
        compiler_params=pltpu.CompilerParams(
            dimension_semantics=("parallel",),
            vmem_limit_bytes=vmem_limit),
        cost_estimate=pl.CostEstimate(
            flops=flops, transcendentals=0, bytes_accessed=bytes_accessed),
        interpret=interpret,
    )(*args)

    return out.reshape(*lead_shape, size_out)


# ---------------------------------------------------------------------------
# Parameter init (matches the PyTorch module's shapes/init) and a JAX reference
# ---------------------------------------------------------------------------

def init_resnet_block_params(key, size_in, size_out=None, size_h=None,
                             dtype=jnp.float32):
    """Deterministic synthetic init matching the PyTorch module's shapes.

    fc_1.weight is zero-initialized, exactly as in the module's __init__.
    Weights are stored as (in_features, out_features) so the kernel does x @ W.
    """
    if size_out is None:
        size_out = size_in
    if size_h is None:
        size_h = min(size_in, size_out)
    k0, k1, k2, k3 = jax.random.split(key, 4)
    w0 = (jax.random.normal(k0, (size_in, size_h)) * 0.1).astype(dtype)
    b0 = (jax.random.normal(k1, (size_h,)) * 0.1).astype(dtype)
    w1 = jnp.zeros((size_h, size_out), dtype)      # nn.init.zeros_(fc_1.weight)
    b1 = (jax.random.normal(k2, (size_out,)) * 0.1).astype(dtype)
    params = {"w0": w0, "b0": b0, "w1": w1, "b1": b1}
    if size_in != size_out:
        params["ws"] = (jax.random.normal(k3, (size_in, size_out)) * 0.1).astype(dtype)
    return params


def _reference(x, params):
    """Pure-JAX (f32) reference of the PyTorch forward pass."""
    f32 = jnp.float32
    relu = lambda v: jnp.maximum(v, 0.0)
    xf = x.astype(f32)
    net = relu(xf) @ params["w0"].astype(f32) + params["b0"].astype(f32)
    dx = relu(net) @ params["w1"].astype(f32) + params["b1"].astype(f32)
    x_s = xf @ params["ws"].astype(f32) if "ws" in params else xf
    return (x_s + dx).astype(x.dtype)


if __name__ == "__main__":
    key = jax.random.PRNGKey(0)
    kx, kx2, kp1, kp2, kw = jax.random.split(key, 5)

    # Case 1: size_in != size_out -> linear shortcut. pts=7 makes the flattened
    # row count (14) a non-multiple of the row tile -> exercises the ragged
    # last grid block (masked OOB writes). Override the zero-initialized fc_1
    # weight so the second matmul path is exercised.
    batch, pts, size_in, size_out = 2, 7, 16, 64
    x = jax.random.normal(kx, (batch, pts, size_in), jnp.float32)
    params = init_resnet_block_params(kp1, size_in, size_out)
    params["w1"] = jax.random.normal(kw, params["w1"].shape, jnp.float32) * 0.1
    out = jax.block_until_ready(resnet_block_fc(x, params))
    ref = _reference(x, params)
    assert out.shape == (batch, pts, size_out)
    assert jnp.allclose(out, ref, atol=1e-5, rtol=1e-5)

    # Case 2: size_in == size_out -> identity shortcut (PyTorch default init).
    x2 = jax.random.normal(kx2, (2, 8, size_in), jnp.float32)
    params_id = init_resnet_block_params(kp2, size_in)
    out_id = jax.block_until_ready(resnet_block_fc(x2, params_id))
    ref_id = _reference(x2, params_id)
    assert out_id.shape == (2, 8, size_in)
    assert jnp.allclose(out_id, ref_id, atol=1e-5, rtol=1e-5)

    # Case 3: bf16 activations/weights (MXU-native path, f32 accumulation).
    x_bf = x2.astype(jnp.bfloat16)
    params_bf = {k: v.astype(jnp.bfloat16) for k, v in params.items()}
    out_bf = jax.block_until_ready(resnet_block_fc(x_bf, params_bf))
    ref_bf = _reference(x_bf, params_bf)
    assert out_bf.dtype == jnp.bfloat16
    assert out_bf.shape == (2, 8, size_out)
    assert jnp.allclose(out_bf.astype(jnp.float32), ref_bf.astype(jnp.float32),
                        atol=5e-2, rtol=5e-2)

    print("KERNEL_OK")
</pallas_src>

<mosaic_0001>
module attributes {stable_mosaic.version = 11 : i64} {
  func.func @_probe_kernel(%arg0: i32, %arg1: memref<8x128xf32, #tpu.memory_space<vmem>>, %arg2: memref<8x128xf32, #tpu.memory_space<vmem>>, %arg3: memref<8x128xf32, #tpu.memory_space<vmem>>) attributes {dimension_semantics = [#tpu.dimension_semantics<arbitrary>], iteration_bounds = array<i64: 2>, scalar_prefetch = 0 : i64, scratch_operands = 0 : i64, tpu.core_type = #tpu.core_type<tc>, window_params = [{transform_indices = @transform_0, window_bounds = array<i64: 8, 128>}, {pipeline_mode = #tpu.pipeline_mode<synchronous>, transform_indices = @transform_1, window_bounds = array<i64: 8, 128>}, {transform_indices = @transform_2, window_bounds = array<i64: 8, 128>}]} {
    %c0 = arith.constant 0 : index
    %c0_0 = arith.constant 0 : index
    %0 = vector.load %arg1[%c0, %c0_0] : memref<8x128xf32, #tpu.memory_space<vmem>>, vector<8x128xf32>
    %c0_1 = arith.constant 0 : index
    %c0_2 = arith.constant 0 : index
    %1 = vector.load %arg2[%c0_1, %c0_2] : memref<8x128xf32, #tpu.memory_space<vmem>>, vector<8x128xf32>
    %2 = arith.addf %0, %1 : vector<8x128xf32>
    %c0_3 = arith.constant 0 : index
    %c0_4 = arith.constant 0 : index
    %3 = vector.load %arg3[%c0_3, %c0_4] : memref<8x128xf32, #tpu.memory_space<vmem>>, vector<8x128xf32>
    tpu.vector_store %arg3[%c0_3, %c0_4], %2 {strides = array<i32>} : memref<8x128xf32, #tpu.memory_space<vmem>>, vector<8x128xf32>,
    return
  }
  func.func @transform_0(%arg0: i32) -> (i32, i32) {
    %c0_i32 = arith.constant 0 : i32
    %c0_i32_0 = arith.constant 0 : i32
    return %arg0, %c0_i32 : i32, i32
  }
  func.func @transform_1(%arg0: i32) -> (i32, i32) {
    %c0_i32 = arith.constant 0 : i32
    %c0_i32_0 = arith.constant 0 : i32
    %c0_i32_1 = arith.constant 0 : i32
    return %c0_i32, %c0_i32_0 : i32, i32
  }
  func.func @transform_2(%arg0: i32) -> (i32, i32) {
    %c0_i32 = arith.constant 0 : i32
    %c0_i32_0 = arith.constant 0 : i32
    return %arg0, %c0_i32 : i32, i32
  }
}

module attributes {stable_mosaic.version = 11 : i64} {
  func.func @_resnet_block_kernel_shortcut(%arg0: i32, %arg1: memref<8x16xf32, #tpu.memory_space<vmem>>, %arg2: memref<16x16xf32, #tpu.memory_space<vmem>>, %arg3: memref<1x16xf32, #tpu.memory_space<vmem>>, %arg4: memref<16x64xf32, #tpu.memory_space<vmem>>, %arg5: memref<1x64xf32, #tpu.memory_space<vmem>>, %arg6: memref<16x64xf32, #tpu.memory_space<vmem>>, %arg7: memref<8x64xf32, #tpu.memory_space<vmem>>) attributes {dimension_semantics = [#tpu.dimension_semantics<parallel>], iteration_bounds = array<i64: 2>, scalar_prefetch = 0 : i64, scratch_operands = 0 : i64, tpu.core_type = #tpu.core_type<tc>, window_params = [{transform_indices = @transform_0, window_bounds = array<i64: 8, 16>}, {pipeline_mode = #tpu.pipeline_mode<synchronous>, transform_indices = @transform_1, window_bounds = array<i64: 16, 16>}, {pipeline_mode = #tpu.pipeline_mode<synchronous>, transform_indices = @transform_2, window_bounds = array<i64: 1, 16>}, {pipeline_mode = #tpu.pipeline_mode<synchronous>, transform_indices = @transform_3, window_bounds = array<i64: 16, 64>}, {pipeline_mode = #tpu.pipeline_mode<synchronous>, transform_indices = @transform_4, window_bounds = array<i64: 1, 64>}, {pipeline_mode = #tpu.pipeline_mode<synchronous>, transform_indices = @transform_5, window_bounds = array<i64: 16, 64>}, {transform_indices = @transform_6, window_bounds = array<i64: 8, 64>}]} {
    %c0 = arith.constant 0 : index
    %c0_0 = arith.constant 0 : index
    %0 = vector.load %arg1[%c0, %c0_0] : memref<8x16xf32, #tpu.memory_space<vmem>>, vector<8x16xf32>
    %cst = arith.constant 0.000000e+00 : f32
    %1 = vector.broadcast %cst : f32 to vector<8x16xf32>
    %2 = arith.maximumf %0, %1 : vector<8x16xf32>
    %c0_1 = arith.constant 0 : index
    %c0_2 = arith.constant 0 : index
    %3 = vector.load %arg2[%c0_1, %c0_2] : memref<16x16xf32, #tpu.memory_space<vmem>>, vector<16x16xf32>
    %cst_3 = arith.constant dense<0.000000e+00> : vector<8x16xf32>
    %4 = tpu.matmul %2, %3, %cst_3 {dimension_numbers = #tpu.dot_dimension_numbers<[1], [0], [0], [1], [0, 0, 1, 1], [], []>} : vector<8x16xf32>, vector<16x16xf32>, vector<8x16xf32> -> vector<8x16xf32>
    %c0_4 = arith.constant 0 : index
    %c0_5 = arith.constant 0 : index
    %5 = vector.load %arg3[%c0_4, %c0_5] : memref<1x16xf32, #tpu.memory_space<vmem>>, vector<1x16xf32>
    %6 = vector.broadcast %5 : vector<1x16xf32> to vector<8x16xf32>
    %7 = arith.addf %4, %6 : vector<8x16xf32>
    %cst_6 = arith.constant 0.000000e+00 : f32
    %8 = vector.broadcast %cst_6 : f32 to vector<8x16xf32>
    %9 = arith.maximumf %7, %8 : vector<8x16xf32>
    %c0_7 = arith.constant 0 : index
    %c0_8 = arith.constant 0 : index
    %10 = vector.load %arg4[%c0_7, %c0_8] : memref<16x64xf32, #tpu.memory_space<vmem>>, vector<16x64xf32>
    %cst_9 = arith.constant dense<0.000000e+00> : vector<8x64xf32>
    %11 = tpu.matmul %9, %10, %cst_9 {dimension_numbers = #tpu.dot_dimension_numbers<[1], [0], [0], [1], [0, 0, 1, 1], [], []>} : vector<8x16xf32>, vector<16x64xf32>, vector<8x64xf32> -> vector<8x64xf32>
    %c0_10 = arith.constant 0 : index
    %c0_11 = arith.constant 0 : index
    %12 = vector.load %arg5[%c0_10, %c0_11] : memref<1x64xf32, #tpu.memory_space<vmem>>, vector<1x64xf32>
    %13 = vector.broadcast %12 : vector<1x64xf32> to vector<8x64xf32>
    %14 = arith.addf %11, %13 : vector<8x64xf32>
    %c0_12 = arith.constant 0 : index
    %c0_13 = arith.constant 0 : index
    %15 = vector.load %arg6[%c0_12, %c0_13] : memref<16x64xf32, #tpu.memory_space<vmem>>, vector<16x64xf32>
    %cst_14 = arith.constant dense<0.000000e+00> : vector<8x64xf32>
    %16 = tpu.matmul %0, %15, %cst_14 {dimension_numbers = #tpu.dot_dimension_numbers<[1], [0], [0], [1], [0, 0, 1, 1], [], []>} : vector<8x16xf32>, vector<16x64xf32>, vector<8x64xf32> -> vector<8x64xf32>
    %17 = arith.addf %16, %14 : vector<8x64xf32>
    %c0_15 = arith.constant 0 : index
    %c0_16 = arith.constant 0 : index
    %18 = vector.load %arg7[%c0_15, %c0_16] : memref<8x64xf32, #tpu.memory_space<vmem>>, vector<8x64xf32>
    tpu.vector_store %arg7[%c0_15, %c0_16], %17 {strides = array<i32>} : memref<8x64xf32, #tpu.memory_space<vmem>>, vector<8x64xf32>,
    return
  }
  func.func @transform_0(%arg0: i32) -> (i32, i32) {
    %c0_i32 = arith.constant 0 : i32
    %c0_i32_0 = arith.constant 0 : i32
    return %arg0, %c0_i32 : i32, i32
  }
  func.func @transform_1(%arg0: i32) -> (i32, i32) {
    %c0_i32 = arith.constant 0 : i32
    %c0_i32_0 = arith.constant 0 : i32
    %c0_i32_1 = arith.constant 0 : i32
    return %c0_i32, %c0_i32_0 : i32, i32
  }
  func.func @transform_2(%arg0: i32) -> (i32, i32) {
    %c0_i32 = arith.constant 0 : i32
    %c0_i32_0 = arith.constant 0 : i32
    %c0_i32_1 = arith.constant 0 : i32
    return %c0_i32, %c0_i32_0 : i32, i32
  }
  func.func @transform_3(%arg0: i32) -> (i32, i32) {
    %c0_i32 = arith.constant 0 : i32
    %c0_i32_0 = arith.constant 0 : i32
    %c0_i32_1 = arith.constant 0 : i32
    return %c0_i32, %c0_i32_0 : i32, i32
  }
  func.func @transform_4(%arg0: i32) -> (i32, i32) {
    %c0_i32 = arith.constant 0 : i32
    %c0_i32_0 = arith.constant 0 : i32
    %c0_i32_1 = arith.constant 0 : i32
    return %c0_i32, %c0_i32_0 : i32, i32
  }
  func.func @transform_5(%arg0: i32) -> (i32, i32) {
    %c0_i32 = arith.constant 0 : i32
    %c0_i32_0 = arith.constant 0 : i32
    %c0_i32_1 = arith.constant 0 : i32
    return %c0_i32, %c0_i32_0 : i32, i32
  }
  func.func @transform_6(%arg0: i32) -> (i32, i32) {
    %c0_i32 = arith.constant 0 : i32
    %c0_i32_0 = arith.constant 0 : i32
    return %arg0, %c0_i32 : i32, i32
  }
}

</mosaic_0001>

<llo_original>
// kernel: tpu_custom_call.1
$region0: #{tpu_custom_call.1}
  #allocation0 [shape = 'u32[]', space=smem, size = 0x4, offset = 0x4, fixed_abs, tag = 'smem constant byte address 0x4 - core index']
  #allocation1 [shape = 'u32[144,128]{1,0:T(1,128)}', space=vmem, size = 0x12000, scoped, tag = 'internal scratch']
  %s0 = inlined_call_operand.hbm [shape: f32[16,128], index: 0, kind: input, shape index: {}]
  %s1 = inlined_call_operand.hbm [shape: f32[8,128], index: 1, kind: input, shape index: {}]
  %s2 = inlined_call_operand.hbm [shape: f32[16,128], index: 2, kind: output, shape index: {}]
  %s3 = sld [smem:[#allocation0]]
  $region49: #{tpu_custom_call.1} parent=0
    _
  %s5 = ssub.s32 1, %s3
  %s6 = scalar_select 0, %s5, %s3
  $region1: #{tpu_custom_call.1} parent=0
    #allocation2 [shape = 'u8[8192]{0}', space=vmem, size = 0x2000, scoped, tag = 'input window, operand 0']
    #allocation3 [shape = 's32[2]{0}', space=sflag, size = 0x8, scoped, tag = 'scoped memory for tpu_custom_call.1']
    #allocation4 [shape = 's32[2]{0}', space=sflag, size = 0x8, scoped, tag = 'scoped memory for tpu_custom_call.1']
    #allocation5 [shape = 'u8[4096]{0}', space=vmem, size = 0x1000, scoped, tag = 'input window, operand 1, single buffered']
    #allocation6 [shape = 's32[1]{0}', space=sflag, size = 0x4, scoped, tag = 'scoped memory for tpu_custom_call.1']
    #allocation7 [shape = 'u8[8192]{0}', space=vmem, size = 0x2000, scoped, tag = 'output window, operand 0']
    %7 = vsyncpa [#allocation3], 0
    %s8 = scalar_lea.sflag [#allocation3], 1
    %9 = vsyncpa %s8, 0
    %10 = vsyncpa [#allocation6], 0
    %11 = vsyncpa [#allocation4], 0
    %s12 = scalar_lea.sflag [#allocation4], 1
    %13 = vsyncpa %s12, 0
    loop: start=0, step=1, limit=4
    $region2: #{tpu_custom_call.1} parent=1 // loop_pre_header
      _
    $region3: #{tpu_custom_call.1} parent=1 // loop_header
      %s15 = sphi 0, %s19
      %p16 = scmp.ge.s32.totalorder %s15, 4
      %s25 = sphi 0, %s27
      %s28 = sphi 0, %s25
      %s29 = sphi 0, %s28
      %s45 = sphi 0, %s29
      %s49 = sphi 0, %s49
      %s51 = sphi 0, %s49
      %s52 = sphi 0, %s51
      %s66 = sphi 0, %s52
      %s72 = sphi 0, %s74
      %s75 = sphi 0, %s72
      %s76 = sphi 0, %s75
      %s92 = sphi 0, %s76
    $region4: #{tpu_custom_call.1} parent=1 // loop_header_branch
      %18 = sbr.rel (%p16) target = $region8
    $region5: #{tpu_custom_call.1} parent=1 // loop_body
      %s20 = ssub.s32 %s15, 1
      %s21 = ssub.s32 %s15, 2
      %s22 = sadd.s32 %s15, 1
      %s23 = ssub.s32 %s15, %s22
      %p24 = scmp.eq.s32.totalorder %s23, 0
      %s26 = sadd.s32 %s25, 1
      %s27 = scalar_select %p24, %s25, %s26
      %p30 = pneg %p24
      %p31 = scmp.eq.s32.totalorder %s15, 1
      %p32 = por %p30, %p31
      %p33 = scmp.ne.s32.totalorder %s25, %s28
      %p34 = scmp.eq.s32.totalorder %s15, 0
      %p35 = por %p33, %p34
      %p36 = scmp.ne.s32.totalorder %s25, %s28
      %p37 = scmp.eq.s32.totalorder %s20, 1
      %p38 = por %p36, %p37
      %p39 = scmp.ne.s32.totalorder %s28, %s29
      %p40 = scmp.eq.s32.totalorder %s20, 0
      %p41 = por %p39, %p40
      %p42 = scmp.ne.s32.totalorder %s28, %s29
      %p43 = scmp.eq.s32.totalorder %s21, 1
      %p44 = por %p42, %p43
      %p46 = scmp.ne.s32.totalorder %s29, %s45
      %p47 = scmp.eq.s32.totalorder %s21, 0
      %p48 = por %p46, %p47
      %s50 = sadd.s32 %s49, 1
      %p53 = scmp.eq.s32.totalorder %s15, 1
      %p54 = scmp.ne.s32.totalorder %s49, %s51
      %p55 = scmp.eq.s32.totalorder %s15, 0
      %p56 = por %p54, %p55
      %p57 = scmp.ne.s32.totalorder %s49, %s51
      %p58 = scmp.eq.s32.totalorder %s20, 1
      %p59 = por %p57, %p58
      %p60 = scmp.ne.s32.totalorder %s51, %s52
      %p61 = scmp.eq.s32.totalorder %s20, 0
      %p62 = por %p60, %p61
      %p63 = scmp.ne.s32.totalorder %s51, %s52
      %p64 = scmp.eq.s32.totalorder %s21, 1
      %p65 = por %p63, %p64
      %p67 = scmp.ne.s32.totalorder %s52, %s66
      %p68 = scmp.eq.s32.totalorder %s21, 0
      %p69 = por %p67, %p68
      %s70 = ssub.s32 %s15, %s22
      %p71 = scmp.eq.s32.totalorder %s70, 0
      %s73 = sadd.s32 %s72, 1
      %s74 = scalar_select %p71, %s72, %s73
      %p77 = pneg %p71
      %p78 = scmp.eq.s32.totalorder %s15, 1
      %p79 = por %p77, %p78
      %p80 = scmp.ne.s32.totalorder %s72, %s75
      %p81 = scmp.eq.s32.totalorder %s15, 0
      %p82 = por %p80, %p81
      %p83 = scmp.ne.s32.totalorder %s72, %s75
      %p84 = scmp.eq.s32.totalorder %s20, 1
      %p85 = por %p83, %p84
      %p86 = scmp.ne.s32.totalorder %s75, %s76
      %p87 = scmp.eq.s32.totalorder %s20, 0
      %p88 = por %p86, %p87
      %p89 = scmp.ne.s32.totalorder %s75, %s76
      %p90 = scmp.eq.s32.totalorder %s21, 1
      %p91 = por %p89, %p90
      %p93 = scmp.ne.s32.totalorder %s76, %s92
      %p94 = scmp.eq.s32.totalorder %s21, 0
      %p95 = por %p93, %p94
      %p96 = scmp.le.s32.totalorder 1, %s15
      %p97 = scmp.lt.s32.totalorder %s15, 3
      %p98 = pnand %p96, %p97
      %p99 = pneg %p98
      // Predicated region
      $region9: #{tpu_custom_call.1} parent=5 // pred_check
        _
      $region10: #{tpu_custom_call.1} parent=5 // pred_check_branch
        %101 = sbr.rel (%p98) target = $region12
      $region11: #{tpu_custom_call.1} parent=5 // pred_region
        %s102 = ssub.s32 %s15, 1
        // Predicated region
        $region13: #{tpu_custom_call.1} parent=11 // pred_check
          %p103 = pneg %p62
        $region14: #{tpu_custom_call.1} parent=11 // pred_check_branch
          %105 = sbr.rel (%p103) target = $region16
        $region15: #{tpu_custom_call.1} parent=11 // pred_region
          %s107 = ssub.s32 128, 128
          %108 = vsyncadd [#allocation6], %s107
          %s110 = sshll.u32 [#allocation5], 4
          %s111 = int_to_ptr.vmem [resolvable:$true] %s110
          %113 = dma.hbm_to_vmem [thread:$0]  %s1, 128, %s111, [#allocation6]
        $region16: #{tpu_custom_call.1} parent=11 // pred_fallthru
          _
      $region12: #{tpu_custom_call.1} parent=5 // pred_fallthru
        _
      %p114 = scmp.lt.s32.totalorder %s15, 2
      // Predicated region
      $region17: #{tpu_custom_call.1} parent=5 // pred_check
        %p115 = pneg %p114
      $region18: #{tpu_custom_call.1} parent=5 // pred_check_branch
        %117 = sbr.rel (%p115) target = $region20
      $region19: #{tpu_custom_call.1} parent=5 // pred_region
        // Predicated region
        $region21: #{tpu_custom_call.1} parent=19 // pred_check
          %p118 = pneg %p35
        $region22: #{tpu_custom_call.1} parent=19 // pred_check_branch
          %120 = sbr.rel (%p118) target = $region24
        $region23: #{tpu_custom_call.1} parent=19 // pred_region
          %s121 = sand.u32 %s25, 1
          %s122 = scalar_lea.sflag [#allocation3], %s121
          %s123 = sand.u32 %s25, 1
          %s124 = smul.addr %s123, 8
          %s125 = scalar_lea.vmem [#allocation2], %s124
          %s127 = ssub.s32 128, 128
          %128 = vsyncadd %s122, %s127
          %s129 = smul.addr %s15, 128
          %s130 = scalar_lea.hbm %s0, %s129
          %s132 = sshll.u32 %s125, 4
          %s133 = int_to_ptr.vmem [resolvable:$true] %s132
          %135 = dma.hbm_to_vmem [thread:$0]  %s130, 128, %s133, %s122
        $region24: #{tpu_custom_call.1} parent=19 // pred_fallthru
          _
      $region20: #{tpu_custom_call.1} parent=5 // pred_fallthru
        _
      %p136 = scmp.le.s32.totalorder 1, %s15
      %p137 = scmp.lt.s32.totalorder %s15, 3
      %p138 = pnand %p136, %p137
      %p139 = pneg %p138
      // Predicated region
      $region25: #{tpu_custom_call.1} parent=5 // pred_check
        _
      $region26: #{tpu_custom_call.1} parent=5 // pred_check_branch
        %141 = sbr.rel (%p138) target = $region28
      $region27: #{tpu_custom_call.1} parent=5 // pred_region
        %s142 = ssub.s32 %s15, 1
        %s143 = sand.u32 %s28, 1
        %s144 = scalar_lea.sflag [#allocation3], %s143
        %s145 = sand.u32 %s28, 1
        %s146 = smul.addr %s145, 8
        %s147 = scalar_lea.vmem [#allocation2], %s146
        // Predicated region
        $region29: #{tpu_custom_call.1} parent=27 // pred_check
          %p148 = pneg %p41
        $region30: #{tpu_custom_call.1} parent=27 // pred_check_branch
          %150 = sbr.rel (%p148) target = $region32
        $region31: #{tpu_custom_call.1} parent=27 // pred_region
          %151 = dma.done %s144, 128
        $region32: #{tpu_custom_call.1} parent=27 // pred_fallthru
          _
        // Predicated region
        $region33: #{tpu_custom_call.1} parent=27 // pred_check
          %p152 = pneg %p62
        $region34: #{tpu_custom_call.1} parent=27 // pred_check_branch
          %154 = sbr.rel (%p152) target = $region36
        $region35: #{tpu_custom_call.1} parent=27 // pred_region
          %155 = dma.done [#allocation6], 128
        $region36: #{tpu_custom_call.1} parent=27 // pred_fallthru
          _
        %s156 = sand.u32 %s28, 1
        %s157 = scalar_lea.sflag [#allocation3], %s156
        %s158 = sand.u32 %s28, 1
        %s159 = smul.addr %s158, 8
        %s160 = scalar_lea.vmem [#allocation2], %s159
        %p161 = pneg %p41
        %p162 = pneg %p38
        %p163 = pneg %p62
        %p164 = pneg %p59
        %p165 = pneg %p88
        %p166 = pneg %p85
        %s167 = sand.u32 %s75, 1
        %s168 = scalar_lea.sflag [#allocation4], %s167
        %s169 = sand.u32 %s75, 1
        %s170 = smul.addr %s169, 8
        %s171 = scalar_lea.vmem [#allocation7], %s170
        %v172 = vld [vmem:[%s147] sm:$0xff]
        %v173 = vld [vmem:[#allocation5] sm:$0xff]
        %v174 = vadd.f32 %v172, %v173
        %175 = vst [vmem:[%s171] sm:$0xff] %v174
        %s176 = sand.u32 %s75, 1
        %s177 = scalar_lea.sflag [#allocation4], %s176
        %s178 = sand.u32 %s75, 1
        %s179 = smul.addr %s178, 8
        %s180 = scalar_lea.vmem [#allocation7], %s179
        // Predicated region
        $region37: #{tpu_custom_call.1} parent=27 // pred_check
          %p181 = pneg %p85
        $region38: #{tpu_custom_call.1} parent=27 // pred_check_branch
          %183 = sbr.rel (%p181) target = $region40
        $region39: #{tpu_custom_call.1} parent=27 // pred_region
          %s185 = ssub.s32 128, 128
          %186 = vsyncadd %s177, %s185
          %s187 = smul.addr %s20, 128
          %s188 = scalar_lea.hbm %s2, %s187
          %s190 = sshll.u32 %s180, 4
          %s191 = int_to_ptr.vmem [resolvable:$true] %s190
          %193 = dma.vmem_to_hbm [thread:$0]  %s191, 128, %s188, %s177
        $region40: #{tpu_custom_call.1} parent=27 // pred_fallthru
          _
      $region28: #{tpu_custom_call.1} parent=5 // pred_fallthru
        _
      %p194 = scmp.le.s32.totalorder 2, %s15
      // Predicated region
      $region41: #{tpu_custom_call.1} parent=5 // pred_check
        %p195 = pneg %p194
      $region42: #{tpu_custom_call.1} parent=5 // pred_check_branch
        %197 = sbr.rel (%p195) target = $region44
      $region43: #{tpu_custom_call.1} parent=5 // pred_region
        %s198 = ssub.s32 %s15, 2
        // Predicated region
        $region45: #{tpu_custom_call.1} parent=43 // pred_check
          %p199 = pneg %p91
        $region46: #{tpu_custom_call.1} parent=43 // pred_check_branch
          %201 = sbr.rel (%p199) target = $region48
        $region47: #{tpu_custom_call.1} parent=43 // pred_region
          %s202 = sand.u32 %s76, 1
          %s203 = scalar_lea.sflag [#allocation4], %s202
          %s204 = sand.u32 %s76, 1
          %s205 = smul.addr %s204, 8
          %s206 = scalar_lea.vmem [#allocation7], %s205
          %207 = dma.done %s203, 128
        $region48: #{tpu_custom_call.1} parent=43 // pred_fallthru
          _
      $region44: #{tpu_custom_call.1} parent=5 // pred_fallthru
        _
    $region6: #{tpu_custom_call.1} parent=1 // loop_footer
      %s19 = sadd.s32 1, %s15
    $region7: #{tpu_custom_call.1} parent=1 // loop_footer_branch
      %14 = sbr.rel target = $region3
    $region8: #{tpu_custom_call.1} parent=1 // loop_exit
      _
    %208 = vsyncpa [#allocation3], 1
    %s209 = scalar_lea.sflag [#allocation3], 1
    %210 = vsyncpa %s209, 1
    %211 = vsyncpa [#allocation6], 1
    %212 = vsyncpa [#allocation4], 1
    %s213 = scalar_lea.sflag [#allocation4], 1
    %214 = vsyncpa %s213, 1

// kernel: tpu_custom_call.1
$region0: #{tpu_custom_call.1}
  #allocation0 [shape = 'u32[]', space=smem, size = 0x4, offset = 0x4, fixed_abs, tag = 'smem constant byte address 0x4 - core index']
  #allocation1 [shape = 'u32[144,128]{1,0:T(1,128)}', space=vmem, size = 0x12000, scoped, tag = 'internal scratch']
  %s0 = inlined_call_operand.hbm [shape: f32[14,16], index: 0, kind: input, shape index: {}]
  %s1 = inlined_call_operand.hbm [shape: f32[16,16], index: 1, kind: input, shape index: {}]
  %s2 = inlined_call_operand.vmem [shape: f32[1,16], index: 2, kind: input, shape index: {}]
  %s3 = inlined_call_operand.hbm [shape: f32[16,64], index: 3, kind: input, shape index: {}]
  %s4 = inlined_call_operand.vmem [shape: f32[1,64], index: 4, kind: input, shape index: {}]
  %s5 = inlined_call_operand.hbm [shape: f32[16,64], index: 5, kind: input, shape index: {}]
  %s6 = inlined_call_operand.hbm [shape: f32[14,64], index: 6, kind: output, shape index: {}]
  %s7 = sld [smem:[#allocation0]]
  $region73: #{tpu_custom_call.1} parent=0
    _
  %s9 = ssub.s32 1, %s7
  %s10 = scalar_select 0, %s9, %s7
  $region1: #{tpu_custom_call.1} parent=0
    #allocation2 [shape = 'u8[8192]{0}', space=vmem, size = 0x2000, scoped, tag = 'input window, operand 0']
    #allocation3 [shape = 's32[2]{0}', space=sflag, size = 0x8, scoped, tag = 'scoped memory for tpu_custom_call.1']
    #allocation4 [shape = 's32[2]{0}', space=sflag, size = 0x8, scoped, tag = 'scoped memory for tpu_custom_call.1']
    #allocation5 [shape = 'u8[8192]{0}', space=vmem, size = 0x2000, scoped, tag = 'input window, operand 1, single buffered']
    #allocation6 [shape = 's32[1]{0}', space=sflag, size = 0x4, scoped, tag = 'scoped memory for tpu_custom_call.1']
    #allocation7 [shape = 'u8[8192]{0}', space=vmem, size = 0x2000, scoped, tag = 'input window, operand 3, single buffered']
    #allocation8 [shape = 'u8[8192]{0}', space=vmem, size = 0x2000, scoped, tag = 'input window, operand 5, single buffered']
    #allocation9 [shape = 's32[1]{0}', space=sflag, size = 0x4, scoped, tag = 'scoped memory for tpu_custom_call.1']
    #allocation10 [shape = 'u8[8192]{0}', space=vmem, size = 0x2000, scoped, tag = 'output window, operand 0']
    %11 = vsyncpa [#allocation3], 0
    %s12 = scalar_lea.sflag [#allocation3], 1
    %13 = vsyncpa %s12, 0
    %14 = vsyncpa [#allocation6], 0
    %15 = vsyncpa [#allocation9], 0
    %16 = vsyncpa [#allocation4], 0
    %s17 = scalar_lea.sflag [#allocation4], 1
    %18 = vsyncpa %s17, 0
    loop: start=0, step=1, limit=4
    $region2: #{tpu_custom_call.1} parent=1 // loop_pre_header
      _
    $region3: #{tpu_custom_call.1} parent=1 // loop_header
      %s20 = sphi 0, %s24
      %p21 = scmp.ge.s32.totalorder %s20, 4
      %s30 = sphi 0, %s32
      %s33 = sphi 0, %s30
      %s34 = sphi 0, %s33
      %s50 = sphi 0, %s34
      %s54 = sphi 0, %s54
      %s56 = sphi 0, %s54
      %s57 = sphi 0, %s56
      %s71 = sphi 0, %s57
      %s75 = sphi 0, %s75
      %s77 = sphi 0, %s75
      %s78 = sphi 0, %s77
      %s92 = sphi 0, %s78
      %s96 = sphi 0, %s96
      %s98 = sphi 0, %s96
      %s99 = sphi 0, %s98
      %s113 = sphi 0, %s99
      %s117 = sphi 0, %s117
      %s119 = sphi 0, %s117
      %s120 = sphi 0, %s119
      %s134 = sphi 0, %s120
      %s138 = sphi 0, %s138
      %s140 = sphi 0, %s138
      %s141 = sphi 0, %s140
      %s155 = sphi 0, %s141
      %s161 = sphi 0, %s163
      %s164 = sphi 0, %s161
      %s165 = sphi 0, %s164
      %s181 = sphi 0, %s165
    $region4: #{tpu_custom_call.1} parent=1 // loop_header_branch
      %23 = sbr.rel (%p21) target = $region8
    $region5: #{tpu_custom_call.1} parent=1 // loop_body
      %s25 = ssub.s32 %s20, 1
      %s26 = ssub.s32 %s20, 2
      %s27 = sadd.s32 %s20, 1
      %s28 = ssub.s32 %s20, %s27
      %p29 = scmp.eq.s32.totalorder %s28, 0
      %s31 = sadd.s32 %s30, 1
      %s32 = scalar_select %p29, %s30, %s31
      %p35 = pneg %p29
      %p36 = scmp.eq.s32.totalorder %s20, 1
      %p37 = por %p35, %p36
      %p38 = scmp.ne.s32.totalorder %s30, %s33
      %p39 = scmp.eq.s32.totalorder %s20, 0
      %p40 = por %p38, %p39
      %p41 = scmp.ne.s32.totalorder %s30, %s33
      %p42 = scmp.eq.s32.totalorder %s25, 1
      %p43 = por %p41, %p42
      %p44 = scmp.ne.s32.totalorder %s33, %s34
      %p45 = scmp.eq.s32.totalorder %s25, 0
      %p46 = por %p44, %p45
      %p47 = scmp.ne.s32.totalorder %s33, %s34
      %p48 = scmp.eq.s32.totalorder %s26, 1
      %p49 = por %p47, %p48
      %p51 = scmp.ne.s32.totalorder %s34, %s50
      %p52 = scmp.eq.s32.totalorder %s26, 0
      %p53 = por %p51, %p52
      %s55 = sadd.s32 %s54, 1
      %p58 = scmp.eq.s32.totalorder %s20, 1
      %p59 = scmp.ne.s32.totalorder %s54, %s56
      %p60 = scmp.eq.s32.totalorder %s20, 0
      %p61 = por %p59, %p60
      %p62 = scmp.ne.s32.totalorder %s54, %s56
      %p63 = scmp.eq.s32.totalorder %s25, 1
      %p64 = por %p62, %p63
      %p65 = scmp.ne.s32.totalorder %s56, %s57
      %p66 = scmp.eq.s32.totalorder %s25, 0
      %p67 = por %p65, %p66
      %p68 = scmp.ne.s32.totalorder %s56, %s57
      %p69 = scmp.eq.s32.totalorder %s26, 1
      %p70 = por %p68, %p69
      %p72 = scmp.ne.s32.totalorder %s57, %s71
      %p73 = scmp.eq.s32.totalorder %s26, 0
      %p74 = por %p72, %p73
      %s76 = sadd.s32 %s75, 1
      %p79 = scmp.eq.s32.totalorder %s20, 1
      %p80 = scmp.ne.s32.totalorder %s75, %s77
      %p81 = scmp.eq.s32.totalorder %s20, 0
      %p82 = por %p80, %p81
      %p83 = scmp.ne.s32.totalorder %s75, %s77
      %p84 = scmp.eq.s32.totalorder %s25, 1
      %p85 = por %p83, %p84
      %p86 = scmp.ne.s32.totalorder %s77, %s78
      %p87 = scmp.eq.s32.totalorder %s25, 0
      %p88 = por %p86, %p87
      %p89 = scmp.ne.s32.totalorder %s77, %s78
      %p90 = scmp.eq.s32.totalorder %s26, 1
      %p91 = por %p89, %p90
      %p93 = scmp.ne.s32.totalorder %s78, %s92
      %p94 = scmp.eq.s32.totalorder %s26, 0
      %p95 = por %p93, %p94
      %s97 = sadd.s32 %s96, 1
      %p100 = scmp.eq.s32.totalorder %s20, 1
      %p101 = scmp.ne.s32.totalorder %s96, %s98
      %p102 = scmp.eq.s32.totalorder %s20, 0
      %p103 = por %p101, %p102
      %p104 = scmp.ne.s32.totalorder %s96, %s98
      %p105 = scmp.eq.s32.totalorder %s25, 1
      %p106 = por %p104, %p105
      %p107 = scmp.ne.s32.totalorder %s98, %s99
      %p108 = scmp.eq.s32.totalorder %s25, 0
      %p109 = por %p107, %p108
      %p110 = scmp.ne.s32.totalorder %s98, %s99
      %p111 = scmp.eq.s32.totalorder %s26, 1
      %p112 = por %p110, %p111
      %p114 = scmp.ne.s32.totalorder %s99, %s113
      %p115 = scmp.eq.s32.totalorder %s26, 0
      %p116 = por %p114, %p115
      %s118 = sadd.s32 %s117, 1
      %p121 = scmp.eq.s32.totalorder %s20, 1
      %p122 = scmp.ne.s32.totalorder %s117, %s119
      %p123 = scmp.eq.s32.totalorder %s20, 0
      %p124 = por %p122, %p123
      %p125 = scmp.ne.s32.totalorder %s117, %s119
      %p126 = scmp.eq.s32.totalorder %s25, 1
      %p127 = por %p125, %p126
      %p128 = scmp.ne.s32.totalorder %s119, %s120
      %p129 = scmp.eq.s32.totalorder %s25, 0
      %p130 = por %p128, %p129
      %p131 = scmp.ne.s32.totalorder %s119, %s120
      %p132 = scmp.eq.s32.totalorder %s26, 1
      %p133 = por %p131, %p132
      %p135 = scmp.ne.s32.totalorder %s120, %s134
      %p136 = scmp.eq.s32.totalorder %s26, 0
      %p137 = por %p135, %p136
      %s139 = sadd.s32 %s138, 1
      %p142 = scmp.eq.s32.totalorder %s20, 1
      %p143 = scmp.ne.s32.totalorder %s138, %s140
      %p144 = scmp.eq.s32.totalorder %s20, 0
      %p145 = por %p143, %p144
      %p146 = scmp.ne.s32.totalorder %s138, %s140
      %p147 = scmp.eq.s32.totalorder %s25, 1
      %p148 = por %p146, %p147
      %p149 = scmp.ne.s32.totalorder %s140, %s141
      %p150 = scmp.eq.s32.totalorder %s25, 0
      %p151 = por %p149, %p150
      %p152 = scmp.ne.s32.totalorder %s140, %s141
      %p153 = scmp.eq.s32.totalorder %s26, 1
      %p154 = por %p152, %p153
      %p156 = scmp.ne.s32.totalorder %s141, %s155
      %p157 = scmp.eq.s32.totalorder %s26, 0
      %p158 = por %p156, %p157
      %s159 = ssub.s32 %s20, %s27
      %p160 = scmp.eq.s32.totalorder %s159, 0
      %s162 = sadd.s32 %s161, 1
      %s163 = scalar_select %p160, %s161, %s162
      %p166 = pneg %p160
      %p167 = scmp.eq.s32.totalorder %s20, 1
      %p168 = por %p166, %p167
      %p169 = scmp.ne.s32.totalorder %s161, %s164
      %p170 = scmp.eq.s32.totalorder %s20, 0
      %p171 = por %p169, %p170
      %p172 = scmp.ne.s32.totalorder %s161, %s164
      %p173 = scmp.eq.s32.totalorder %s25, 1
      %p174 = por %p172, %p173
      %p175 = scmp.ne.s32.totalorder %s164, %s165
      %p176 = scmp.eq.s32.totalorder %s25, 0
      %p177 = por %p175, %p176
      %p178 = scmp.ne.s32.totalorder %s164, %s165
      %p179 = scmp.eq.s32.totalorder %s26, 1
      %p180 = por %p178, %p179
      %p182 = scmp.ne.s32.totalorder %s165, %s181
      %p183 = scmp.eq.s32.totalorder %s26, 0
      %p184 = por %p182, %p183
      %p185 = scmp.le.s32.totalorder 1, %s20
      %p186 = scmp.lt.s32.totalorder %s20, 3
      %p187 = pnand %p185, %p186
      %p188 = pneg %p187
      // Predicated region
      $region9: #{tpu_custom_call.1} parent=5 // pred_check
        _
      $region10: #{tpu_custom_call.1} parent=5 // pred_check_branch
        %190 = sbr.rel (%p187) target = $region12
      $region11: #{tpu_custom_call.1} parent=5 // pred_region
        %s191 = ssub.s32 %s20, 1
        // Predicated region
        $region13: #{tpu_custom_call.1} parent=11 // pred_check
          %p192 = pneg %p67
        $region14: #{tpu_custom_call.1} parent=11 // pred_check_branch
          %194 = sbr.rel (%p192) target = $region16
        $region15: #{tpu_custom_call.1} parent=11 // pred_region
          %s196 = ssub.s32 256, 256
          %197 = vsyncadd [#allocation6], %s196
          %s198 = sshll.u32 [#allocation5], 4
          %s199 = int_to_ptr.vmem [resolvable:$true] %s198
          %204 = dma.hbm_to_vmem [thread:$0]  %s1, 256, %s199, [#allocation6], 128, 128, 8
        $region16: #{tpu_custom_call.1} parent=11 // pred_fallthru
          _
        // Predicated region
        $region17: #{tpu_custom_call.1} parent=11 // pred_check
          %p205 = pneg %p88
        $region18: #{tpu_custom_call.1} parent=11 // pred_check_branch
          %207 = sbr.rel (%p205) target = $region20
        $region19: #{tpu_custom_call.1} parent=11 // pred_region
          _
        $region20: #{tpu_custom_call.1} parent=11 // pred_fallthru
          _
        // Predicated region
        $region21: #{tpu_custom_call.1} parent=11 // pred_check
          %p208 = pneg %p109
        $region22: #{tpu_custom_call.1} parent=11 // pred_check_branch
          %210 = sbr.rel (%p208) target = $region24
        $region23: #{tpu_custom_call.1} parent=11 // pred_region
          %s212 = ssub.s32 256, 256
          %213 = vsyncadd [#allocation6], %s212
          %s214 = sshll.u32 [#allocation7], 4
          %s215 = int_to_ptr.vmem [resolvable:$true] %s214
          %220 = dma.hbm_to_vmem [thread:$0]  %s3, 256, %s215, [#allocation6], 128, 128, 8
        $region24: #{tpu_custom_call.1} parent=11 // pred_fallthru
          _
        // Predicated region
        $region25: #{tpu_custom_call.1} parent=11 // pred_check
          %p221 = pneg %p130
        $region26: #{tpu_custom_call.1} parent=11 // pred_check_branch
          %223 = sbr.rel (%p221) target = $region28
        $region27: #{tpu_custom_call.1} parent=11 // pred_region
          _
        $region28: #{tpu_custom_call.1} parent=11 // pred_fallthru
          _
        // Predicated region
        $region29: #{tpu_custom_call.1} parent=11 // pred_check
          %p224 = pneg %p151
        $region30: #{tpu_custom_call.1} parent=11 // pred_check_branch
          %226 = sbr.rel (%p224) target = $region32
        $region31: #{tpu_custom_call.1} parent=11 // pred_region
          %s228 = ssub.s32 256, 256
          %229 = vsyncadd [#allocation9], %s228
          %s230 = sshll.u32 [#allocation8], 4
          %s231 = int_to_ptr.vmem [resolvable:$true] %s230
          %236 = dma.hbm_to_vmem [thread:$0]  %s5, 256, %s231, [#allocation9], 128, 128, 8
        $region32: #{tpu_custom_call.1} parent=11 // pred_fallthru
          _
      $region12: #{tpu_custom_call.1} parent=5 // pred_fallthru
        _
      %p237 = scmp.lt.s32.totalorder %s20, 2
      // Predicated region
      $region33: #{tpu_custom_call.1} parent=5 // pred_check
        %p238 = pneg %p237
      $region34: #{tpu_custom_call.1} parent=5 // pred_check_branch
        %240 = sbr.rel (%p238) target = $region36
      $region35: #{tpu_custom_call.1} parent=5 // pred_region
        // Predicated region
        $region37: #{tpu_custom_call.1} parent=35 // pred_check
          %p241 = pneg %p40
        $region38: #{tpu_custom_call.1} parent=35 // pred_check_branch
          %243 = sbr.rel (%p241) target = $region40
        $region39: #{tpu_custom_call.1} parent=35 // pred_region
          %s244 = sand.u32 %s30, 1
          %s245 = scalar_lea.sflag [#allocation3], %s244
          %s246 = sand.u32 %s30, 1
          %s247 = smul.addr %s246, 8
          %s248 = scalar_lea.vmem [#allocation2], %s247
          %s250 = ssub.s32 128, 128
          %251 = vsyncadd %s245, %s250
          %s252 = smul.addr %s20, 128
          %s253 = scalar_lea.hbm %s0, %s252
          %s255 = sshll.u32 %s248, 4
          %s256 = int_to_ptr.vmem [resolvable:$true] %s255
          %258 = dma.hbm_to_vmem [thread:$0]  %s253, 128, %s256, %s245
        $region40: #{tpu_custom_call.1} parent=35 // pred_fallthru
          _
      $region36: #{tpu_custom_call.1} parent=5 // pred_fallthru
        _
      %p259 = scmp.le.s32.totalorder 1, %s20
      %p260 = scmp.lt.s32.totalorder %s20, 3
      %p261 = pnand %p259, %p260
      %p262 = pneg %p261
      // Predicated region
      $region41: #{tpu_custom_call.1} parent=5 // pred_check
        _
      $region42: #{tpu_custom_call.1} parent=5 // pred_check_branch
        %264 = sbr.rel (%p261) target = $region44
      $region43: #{tpu_custom_call.1} parent=5 // pred_region
        %s265 = ssub.s32 %s20, 1
        %s266 = sand.u32 %s33, 1
        %s267 = scalar_lea.sflag [#allocation3], %s266
        %s268 = sand.u32 %s33, 1
        %s269 = smul.addr %s268, 8
        %s270 = scalar_lea.vmem [#allocation2], %s269
        // Predicated region
        $region45: #{tpu_custom_call.1} parent=43 // pred_check
          %p271 = pneg %p46
        $region46: #{tpu_custom_call.1} parent=43 // pred_check_branch
          %273 = sbr.rel (%p271) target = $region48
        $region47: #{tpu_custom_call.1} parent=43 // pred_region
          %274 = dma.done %s267, 128
        $region48: #{tpu_custom_call.1} parent=43 // pred_fallthru
          _
        // Predicated region
        $region49: #{tpu_custom_call.1} parent=43 // pred_check
          %p275 = pneg %p67
        $region50: #{tpu_custom_call.1} parent=43 // pred_check_branch
          %277 = sbr.rel (%p275) target = $region52
        $region51: #{tpu_custom_call.1} parent=43 // pred_region
          %278 = dma.done [#allocation6], 256
        $region52: #{tpu_custom_call.1} parent=43 // pred_fallthru
          _
        // Predicated region
        $region53: #{tpu_custom_call.1} parent=43 // pred_check
          %p279 = pneg %p109
        $region54: #{tpu_custom_call.1} parent=43 // pred_check_branch
          %281 = sbr.rel (%p279) target = $region56
        $region55: #{tpu_custom_call.1} parent=43 // pred_region
          %282 = dma.done [#allocation6], 256
        $region56: #{tpu_custom_call.1} parent=43 // pred_fallthru
          _
        // Predicated region
        $region57: #{tpu_custom_call.1} parent=43 // pred_check
          %p283 = pneg %p151
        $region58: #{tpu_custom_call.1} parent=43 // pred_check_branch
          %285 = sbr.rel (%p283) target = $region60
        $region59: #{tpu_custom_call.1} parent=43 // pred_region
          %286 = dma.done [#allocation9], 256
        $region60: #{tpu_custom_call.1} parent=43 // pred_fallthru
          _
        %s287 = sand.u32 %s33, 1
        %s288 = scalar_lea.sflag [#allocation3], %s287
        %s289 = sand.u32 %s33, 1
        %s290 = smul.addr %s289, 8
        %s291 = scalar_lea.vmem [#allocation2], %s290
        %p292 = pneg %p46
        %p293 = pneg %p43
        %p294 = pneg %p67
        %p295 = pneg %p64
        %p296 = pneg %p88
        %p297 = pneg %p85
        %p298 = pneg %p109
        %p299 = pneg %p106
        %p300 = pneg %p130
        %p301 = pneg %p127
        %p302 = pneg %p151
        %p303 = pneg %p148
        %p304 = pneg %p177
        %p305 = pneg %p174
        %s306 = sand.u32 %s164, 1
        %s307 = scalar_lea.sflag [#allocation4], %s306
        %s308 = sand.u32 %s164, 1
        %s309 = smul.addr %s308, 8
        %s310 = scalar_lea.vmem [#allocation10], %s309
        %v311 = vld [vmem:[%s270] sm:$0xff]
        %v312 = vmax.f32 %v311, 0.0
        %v313 = vld [vmem:[#allocation5] sm:$0xff]
        %v314 = vld [vmem:[#allocation5 + $0x8] sm:$0xff]
        %v315 = vld [vmem:[%s2] sm:$0x1]
        %v317 = vlaneseq
        %v318 = vshrl.u32 %v317, 7
        %v319 = vsub.s32 0, %v318
        %v320 = vrot.slane %v315, %v319
        %vm322 = vcmask 130048
        %v324 = vsel %vm322, %v312, 0
        %326 = vmatprep.subr.mxu0 0.0
        %327 = vmatpush1.msra.mxu0 0.0
        %328 = vmatprep.subr.mxu0 0.0
        %329 = vmatpush1.msra.mxu0 0.0
        %330 = vmatprep.subr.mxu0 0.0
        %331 = vmatpush1.msra.mxu0 0.0
        %332 = vmatprep.subr.mxu0 0.0
        %333 = vmatpush1.msra.mxu0 0.0
        %334 = vmatprep.subr.mxu0 0.0
        %335 = vmatpush1.msra.mxu0 0.0
        %336 = vmatprep.subr.mxu0 0.0
        %337 = vmatpush1.msra.mxu0 0.0
        %338 = vmatprep.subr.mxu0 0.0
        %339 = vmatpush1.msra.mxu0 0.0
        %340 = vmatprep.subr.mxu0 0.0
        %341 = vmatpush1.msra.mxu0 0.0
        %342 = vmatprep.subr.mxu0 0.0
        %343 = vmatpush1.msra.mxu0 0.0
        %344 = vmatprep.subr.mxu0 0.0
        %345 = vmatpush1.msra.mxu0 0.0
        %346 = vmatprep.subr.mxu0 0.0
        %347 = vmatpush1.msra.mxu0 0.0
        %348 = vmatprep.subr.mxu0 0.0
        %349 = vmatpush1.msra.mxu0 0.0
        %350 = vmatprep.subr.mxu0 0.0
        %351 = vmatpush1.msra.mxu0 0.0
        %352 = vmatprep.subr.mxu0 0.0
        %353 = vmatpush1.msra.mxu0 0.0
        %354 = vmatprep.subr.mxu0 0.0
        %355 = vmatpush1.msra.mxu0 %v314
        %356 = vmatprep.subr.mxu0 0.0
        %357 = vmatpush1.msra.mxu0 %v313
        %358 = vmatprep.subr.mxu0 0.0
        %359 = vmatpush2.msra.mxu0 0.0
        %360 = vmatprep.subr.mxu0 0.0
        %361 = vmatpush2.msra.mxu0 0.0
        %362 = vmatprep.subr.mxu0 0.0
        %363 = vmatpush2.msra.mxu0 0.0
        %364 = vmatprep.subr.mxu0 0.0
        %365 = vmatpush2.msra.mxu0 0.0
        %366 = vmatprep.subr.mxu0 0.0
        %367 = vmatpush2.msra.mxu0 0.0
        %368 = vmatprep.subr.mxu0 0.0
        %369 = vmatpush2.msra.mxu0 0.0
        %370 = vmatprep.subr.mxu0 0.0
        %371 = vmatpush2.msra.mxu0 0.0
        %372 = vmatprep.subr.mxu0 0.0
        %373 = vmatpush2.msra.mxu0 0.0
        %374 = vmatprep.subr.mxu0 0.0
        %375 = vmatpush2.msra.mxu0 0.0
        %376 = vmatprep.subr.mxu0 0.0
        %377 = vmatpush2.msra.mxu0 0.0
        %378 = vmatprep.subr.mxu0 0.0
        %379 = vmatpush2.msra.mxu0 0.0
        %380 = vmatprep.subr.mxu0 0.0
        %381 = vmatpush2.msra.mxu0 0.0
        %382 = vmatprep.subr.mxu0 0.0
        %383 = vmatpush2.msra.mxu0 0.0
        %384 = vmatprep.subr.mxu0 0.0
        %385 = vmatpush2.msra.mxu0 0.0
        %386 = vmatprep.subr.mxu0 0.0
        %387 = vmatpush2.msra.mxu0 0.0
        %388 = vmatprep.subr.mxu0 0.0
        %389 = vmatpush2.msra.mxu0 0.0
        %390 = vmatprep.mubr.f32.mxu0 0.0
        %391 = vmatmul.mubr.f32.gmra.mxu0 %v324
        %v392 = vpop.f32.mrf.mxu0
        %v393 = vadd.f32 %v320, %v392
        %v394 = vpop.f32.mrf.mxu0
        %395 = vdwg.mxu0
        %v396 = vmax.f32 %v393, 0.0
        %v397 = vld [vmem:[#allocation7] sm:$0xff]
        %v398 = vld [vmem:[#allocation7 + $0x8] sm:$0xff]
        %v399 = vld [vmem:[%s4] sm:$0x1]
        %v401 = vlaneseq
        %v402 = vshrl.u32 %v401, 7
        %v403 = vsub.s32 0, %v402
        %v404 = vrot.slane %v399, %v403
        %v407 = vsel %vm322, %v396, 0
        %409 = vmatprep.subr.mxu0 0.0
        %410 = vmatpush1.msra.mxu0 0.0
        %411 = vmatprep.subr.mxu0 0.0
        %412 = vmatpush1.msra.mxu0 0.0
        %413 = vmatprep.subr.mxu0 0.0
        %414 = vmatpush1.msra.mxu0 0.0
        %415 = vmatprep.subr.mxu0 0.0
        %416 = vmatpush1.msra.mxu0 0.0
        %417 = vmatprep.subr.mxu0 0.0
        %418 = vmatpush1.msra.mxu0 0.0
        %419 = vmatprep.subr.mxu0 0.0
        %420 = vmatpush1.msra.mxu0 0.0
        %421 = vmatprep.subr.mxu0 0.0
        %422 = vmatpush1.msra.mxu0 0.0
        %423 = vmatprep.subr.mxu0 0.0
        %424 = vmatpush1.msra.mxu0 0.0
        %425 = vmatprep.subr.mxu0 0.0
        %426 = vmatpush1.msra.mxu0 0.0
        %427 = vmatprep.subr.mxu0 0.0
        %428 = vmatpush1.msra.mxu0 0.0
        %429 = vmatprep.subr.mxu0 0.0
        %430 = vmatpush1.msra.mxu0 0.0
        %431 = vmatprep.subr.mxu0 0.0
        %432 = vmatpush1.msra.mxu0 0.0
        %433 = vmatprep.subr.mxu0 0.0
        %434 = vmatpush1.msra.mxu0 0.0
        %435 = vmatprep.subr.mxu0 0.0
        %436 = vmatpush1.msra.mxu0 0.0
        %437 = vmatprep.subr.mxu0 0.0
        %438 = vmatpush1.msra.mxu0 %v398
        %439 = vmatprep.subr.mxu0 0.0
        %440 = vmatpush1.msra.mxu0 %v397
        %441 = vmatprep.subr.mxu0 0.0
        %442 = vmatpush2.msra.mxu0 0.0
        %443 = vmatprep.subr.mxu0 0.0
        %444 = vmatpush2.msra.mxu0 0.0
        %445 = vmatprep.subr.mxu0 0.0
        %446 = vmatpush2.msra.mxu0 0.0
        %447 = vmatprep.subr.mxu0 0.0
        %448 = vmatpush2.msra.mxu0 0.0
        %449 = vmatprep.subr.mxu0 0.0
        %450 = vmatpush2.msra.mxu0 0.0
        %451 = vmatprep.subr.mxu0 0.0
        %452 = vmatpush2.msra.mxu0 0.0
        %453 = vmatprep.subr.mxu0 0.0
        %454 = vmatpush2.msra.mxu0 0.0
        %455 = vmatprep.subr.mxu0 0.0
        %456 = vmatpush2.msra.mxu0 0.0
        %457 = vmatprep.subr.mxu0 0.0
        %458 = vmatpush2.msra.mxu0 0.0
        %459 = vmatprep.subr.mxu0 0.0
        %460 = vmatpush2.msra.mxu0 0.0
        %461 = vmatprep.subr.mxu0 0.0
        %462 = vmatpush2.msra.mxu0 0.0
        %463 = vmatprep.subr.mxu0 0.0
        %464 = vmatpush2.msra.mxu0 0.0
        %465 = vmatprep.subr.mxu0 0.0
        %466 = vmatpush2.msra.mxu0 0.0
        %467 = vmatprep.subr.mxu0 0.0
        %468 = vmatpush2.msra.mxu0 0.0
        %469 = vmatprep.subr.mxu0 0.0
        %470 = vmatpush2.msra.mxu0 0.0
        %471 = vmatprep.subr.mxu0 0.0
        %472 = vmatpush2.msra.mxu0 0.0
        %473 = vmatprep.mubr.f32.mxu0 0.0
        %474 = vmatmul.mubr.f32.gmra.mxu0 %v407
        %v475 = vpop.f32.mrf.mxu0
        %v476 = vadd.f32 %v404, %v475
        %v477 = vpop.f32.mrf.mxu0
        %478 = vdwg.mxu0
        %v479 = vld [vmem:[#allocation8] sm:$0xff]
        %v480 = vld [vmem:[#allocation8 + $0x8] sm:$0xff]
        %v482 = vsel %vm322, %v311, 0
        %484 = vmatprep.subr.mxu0 0.0
        %485 = vmatpush1.msra.mxu0 0.0
        %486 = vmatprep.subr.mxu0 0.0
        %487 = vmatpush1.msra.mxu0 0.0
        %488 = vmatprep.subr.mxu0 0.0
        %489 = vmatpush1.msra.mxu0 0.0
        %490 = vmatprep.subr.mxu0 0.0
        %491 = vmatpush1.msra.mxu0 0.0
        %492 = vmatprep.subr.mxu0 0.0
        %493 = vmatpush1.msra.mxu0 0.0
        %494 = vmatprep.subr.mxu0 0.0
        %495 = vmatpush1.msra.mxu0 0.0
        %496 = vmatprep.subr.mxu0 0.0
        %497 = vmatpush1.msra.mxu0 0.0
        %498 = vmatprep.subr.mxu0 0.0
        %499 = vmatpush1.msra.mxu0 0.0
        %500 = vmatprep.subr.mxu0 0.0
        %501 = vmatpush1.msra.mxu0 0.0
        %502 = vmatprep.subr.mxu0 0.0
        %503 = vmatpush1.msra.mxu0 0.0
        %504 = vmatprep.subr.mxu0 0.0
        %505 = vmatpush1.msra.mxu0 0.0
        %506 = vmatprep.subr.mxu0 0.0
        %507 = vmatpush1.msra.mxu0 0.0
        %508 = vmatprep.subr.mxu0 0.0
        %509 = vmatpush1.msra.mxu0 0.0
        %510 = vmatprep.subr.mxu0 0.0
        %511 = vmatpush1.msra.mxu0 0.0
        %512 = vmatprep.subr.mxu0 0.0
        %513 = vmatpush1.msra.mxu0 %v480
        %514 = vmatprep.subr.mxu0 0.0
        %515 = vmatpush1.msra.mxu0 %v479
        %516 = vmatprep.subr.mxu0 0.0
        %517 = vmatpush2.msra.mxu0 0.0
        %518 = vmatprep.subr.mxu0 0.0
        %519 = vmatpush2.msra.mxu0 0.0
        %520 = vmatprep.subr.mxu0 0.0
        %521 = vmatpush2.msra.mxu0 0.0
        %522 = vmatprep.subr.mxu0 0.0
        %523 = vmatpush2.msra.mxu0 0.0
        %524 = vmatprep.subr.mxu0 0.0
        %525 = vmatpush2.msra.mxu0 0.0
        %526 = vmatprep.subr.mxu0 0.0
        %527 = vmatpush2.msra.mxu0 0.0
        %528 = vmatprep.subr.mxu0 0.0
        %529 = vmatpush2.msra.mxu0 0.0
        %530 = vmatprep.subr.mxu0 0.0
        %531 = vmatpush2.msra.mxu0 0.0
        %532 = vmatprep.subr.mxu0 0.0
        %533 = vmatpush2.msra.mxu0 0.0
        %534 = vmatprep.subr.mxu0 0.0
        %535 = vmatpush2.msra.mxu0 0.0
        %536 = vmatprep.subr.mxu0 0.0
        %537 = vmatpush2.msra.mxu0 0.0
        %538 = vmatprep.subr.mxu0 0.0
        %539 = vmatpush2.msra.mxu0 0.0
        %540 = vmatprep.subr.mxu0 0.0
        %541 = vmatpush2.msra.mxu0 0.0
        %542 = vmatprep.subr.mxu0 0.0
        %543 = vmatpush2.msra.mxu0 0.0
        %544 = vmatprep.subr.mxu0 0.0
        %545 = vmatpush2.msra.mxu0 0.0
        %546 = vmatprep.subr.mxu0 0.0
        %547 = vmatpush2.msra.mxu0 0.0
        %548 = vmatprep.mubr.f32.mxu0 0.0
        %549 = vmatmul.mubr.f32.gmra.mxu0 %v482
        %v550 = vpop.f32.mrf.mxu0
        %v551 = vadd.f32 %v476, %v550
        %v552 = vpop.f32.mrf.mxu0
        %553 = vdwg.mxu0
        %vm554 = vcmask 523264
        %555 = vst.msk [vmem:[%s310] sm:$0xff] %vm554, %v551
        %s556 = sand.u32 %s164, 1
        %s557 = scalar_lea.sflag [#allocation4], %s556
        %s558 = sand.u32 %s164, 1
        %s559 = smul.addr %s558, 8
        %s560 = scalar_lea.vmem [#allocation10], %s559
        // Predicated region
        $region61: #{tpu_custom_call.1} parent=43 // pred_check
          %p561 = pneg %p174
        $region62: #{tpu_custom_call.1} parent=43 // pred_check_branch
          %563 = sbr.rel (%p561) target = $region64
        $region63: #{tpu_custom_call.1} parent=43 // pred_region
          %s565 = ssub.s32 128, 128
          %566 = vsyncadd %s557, %s565
          %s567 = smul.addr %s25, 128
          %s568 = scalar_lea.hbm %s6, %s567
          %s570 = sshll.u32 %s560, 4
          %s571 = int_to_ptr.vmem [resolvable:$true] %s570
          %573 = dma.vmem_to_hbm [thread:$0]  %s571, 128, %s568, %s557
        $region64: #{tpu_custom_call.1} parent=43 // pred_fallthru
          _
      $region44: #{tpu_custom_call.1} parent=5 // pred_fallthru
        _
      %p574 = scmp.le.s32.totalorder 2, %s20
      // Predicated region
      $region65: #{tpu_custom_call.1} parent=5 // pred_check
        %p575 = pneg %p574
      $region66: #{tpu_custom_call.1} parent=5 // pred_check_branch
        %577 = sbr.rel (%p575) target = $region68
      $region67: #{tpu_custom_call.1} parent=5 // pred_region
        %s578 = ssub.s32 %s20, 2
        // Predicated region
        $region69: #{tpu_custom_call.1} parent=67 // pred_check
          %p579 = pneg %p180
        $region70: #{tpu_custom_call.1} parent=67 // pred_check_branch
          %581 = sbr.rel (%p579) target = $region72
        $region71: #{tpu_custom_call.1} parent=67 // pred_region
          %s582 = sand.u32 %s165, 1
          %s583 = scalar_lea.sflag [#allocation4], %s582
          %s584 = sand.u32 %s165, 1
          %s585 = smul.addr %s584, 8
          %s586 = scalar_lea.vmem [#allocation10], %s585
          %587 = dma.done %s583, 128
        $region72: #{tpu_custom_call.1} parent=67 // pred_fallthru
          _
      $region68: #{tpu_custom_call.1} parent=5 // pred_fallthru
        _
    $region6: #{tpu_custom_call.1} parent=1 // loop_footer
      %s24 = sadd.s32 1, %s20
    $region7: #{tpu_custom_call.1} parent=1 // loop_footer_branch
      %19 = sbr.rel target = $region3
    $region8: #{tpu_custom_call.1} parent=1 // loop_exit
      _
    %588 = vsyncpa [#allocation3], 1
    %s589 = scalar_lea.sflag [#allocation3], 1
    %590 = vsyncpa %s589, 1
    %591 = vsyncpa [#allocation6], 1
    %592 = vsyncpa [#allocation9], 1
    %593 = vsyncpa [#allocation4], 1
    %s594 = scalar_lea.sflag [#allocation4], 1
    %595 = vsyncpa %s594, 1

</llo_original>
